<compile_context>
chip_gen: v7x
topology: tpu7x:2x2x1
jax: 0.10.0
libtpu: 0.0.40
codegen_flags: <defaults>
</compile_context>

<pallas_src>
import functools

import jax
import jax.numpy as jnp
from jax.experimental import pallas as pl
from jax.experimental.pallas import tpu as pltpu


# --------------------------------------------------------------------------
# Pass 1: fused per-channel sum + max pooling over spatial tiles.
# --------------------------------------------------------------------------
def _pool_kernel(x_ref, sum_ref, max_ref):
    # x_ref:   (1, C, thw)   input tile (any float dtype)
    # sum_ref: (1, C, 1)     f32 accumulator, resident across the HW grid axis
    # max_ref: (1, C, 1)     f32 accumulator, resident across the HW grid axis
    s = pl.program_id(1)

    x = x_ref[...].astype(jnp.float32)                 # (1, C, thw)
    part_sum = jnp.sum(x, axis=-1, keepdims=True)      # (1, C, 1)
    part_max = jnp.max(x, axis=-1, keepdims=True)      # (1, C, 1)

    @pl.when(s == 0)
    def _init():
        sum_ref[...] = part_sum
        max_ref[...] = part_max

    @pl.when(s > 0)
    def _accum():
        sum_ref[...] = sum_ref[...] + part_sum
        max_ref[...] = jnp.maximum(max_ref[...], part_max)


# --------------------------------------------------------------------------
# Pass 3: broadcast-multiply writeback  (out = x * gate[channel]).
# --------------------------------------------------------------------------
def _scale_kernel(x_ref, y_ref, out_ref):
    # x_ref:   (1, C, thw)
    # y_ref:   (1, C, 1)    f32 per-channel gate
    # out_ref: (1, C, thw)  same dtype as x
    y = y_ref[...]                                     # (1, C, 1)
    out_ref[...] = (x_ref[...].astype(jnp.float32) * y).astype(out_ref.dtype)


def _choose_hw_tile(hw, c, itemsize, budget_bytes=2 << 20):
    """Largest spatial tile (lane dim) that keeps one x block within budget.

    Returns either the full HW extent, or a divisor of HW that is a multiple
    of 128 (so every block is lane-dense and no padded/masked tiles appear).
    """
    if c * hw * itemsize <= budget_bytes:
        return hw
    max_t = budget_bytes // (c * itemsize)
    t = (max_t // 128) * 128
    while t >= 128:
        if hw % t == 0:
            return t
        t -= 128
    return hw  # fallback: whole spatial extent in a single block


@jax.jit
def channel_attention(x_nchw, fc1_w, fc2_w):
    """CBAM channel attention.

    x_nchw: (B, C, H, W)  float32 or bfloat16
    fc1_w : (C//r, C)     PyTorch nn.Linear weight layout (no bias)
    fc2_w : (C, C//r)
    """
    b, c, h, w = x_nchw.shape
    hw = h * w
    x = x_nchw.reshape(b, c, hw)

    itemsize = jnp.dtype(x.dtype).itemsize
    thw = _choose_hw_tile(hw, c, itemsize)
    n_hw = hw // thw

    tile_bytes = c * thw * itemsize
    # Double-buffered in + out tiles plus headroom; stay under v7x's 64 MiB.
    vmem_limit = int(min(64 << 20, max(32 << 20, 8 * tile_bytes)))

    x_spec = pl.BlockSpec((1, c, thw), lambda bi, si: (bi, 0, si))
    gate_spec = pl.BlockSpec((1, c, 1), lambda bi, si: (bi, 0, 0))
    pooled_shape = jax.ShapeDtypeStruct((b, c, 1), jnp.float32)

    # ---- pass 1: pooling (sum + max), accumulated on-chip -----------------
    sum_x, max_x = pl.pallas_call(
        _pool_kernel,
        out_shape=(pooled_shape, pooled_shape),
        grid=(b, n_hw),
        in_specs=[x_spec],
        out_specs=(gate_spec, gate_spec),
        compiler_params=pltpu.CompilerParams(
            dimension_semantics=("parallel", "arbitrary"),
            vmem_limit_bytes=vmem_limit,
        ),
    )(x)

    # ---- pass 2: tiny shared MLP + sigmoid gate (plain JAX, off hot path) -
    avg = sum_x[..., 0] * (1.0 / float(hw))            # (B, C) f32
    mx = max_x[..., 0]                                 # (B, C) f32
    w1t = fc1_w.astype(jnp.float32).T                  # (C, C//r)
    w2t = fc2_w.astype(jnp.float32).T                  # (C//r, C)

    def mlp(p):
        return jnp.maximum(p @ w1t, 0.0) @ w2t

    gate = jax.nn.sigmoid(mlp(avg) + mlp(mx))          # (B, C) f32
    gate = gate[:, :, None]                            # (B, C, 1)

    # ---- pass 3: lane-dense broadcast multiply ----------------------------
    out = pl.pallas_call(
        _scale_kernel,
        out_shape=jax.ShapeDtypeStruct((b, c, hw), x.dtype),
        grid=(b, n_hw),
        in_specs=[x_spec, gate_spec],
        out_specs=x_spec,
        compiler_params=pltpu.CompilerParams(
            dimension_semantics=("parallel", "parallel"),
            vmem_limit_bytes=vmem_limit,
        ),
    )(x, gate)

    return out.reshape(b, c, h, w)


# --------------------------------------------------------------------------
# Pure-JAX reference matching the PyTorch forward.
# --------------------------------------------------------------------------
def _reference(x, fc1_w, fc2_w):
    xf = x.astype(jnp.float32)
    avg = jnp.mean(xf, axis=(2, 3))
    mx = jnp.max(xf, axis=(2, 3))

    def mlp(p):
        return jnp.maximum(p @ fc1_w.astype(jnp.float32).T, 0.0) @ fc2_w.astype(jnp.float32).T

    y = jax.nn.sigmoid(mlp(avg) + mlp(mx))
    return (xf * y[:, :, None, None]).astype(x.dtype)


if __name__ == "__main__":
    # Small shapes consistent with the module: channels must be >= reduction.
    B, C, H, W = 2, 32, 16, 16
    reduction = 16
    hidden = C // reduction  # 2

    key = jax.random.PRNGKey(0)
    kx, k1, k2 = jax.random.split(key, 3)
    x = jax.random.normal(kx, (B, C, H, W), dtype=jnp.float32)
    # Deterministic synthetic weights (PyTorch nn.Linear weight shapes, no bias).
    fc1_w = jax.random.normal(k1, (hidden, C), dtype=jnp.float32) * 0.1
    fc2_w = jax.random.normal(k2, (C, hidden), dtype=jnp.float32) * 0.1

    # f32 path
    out = jax.block_until_ready(channel_attention(x, fc1_w, fc2_w))
    ref = _reference(x, fc1_w, fc2_w)
    assert out.shape == (B, C, H, W)
    assert jnp.allclose(out, ref, atol=1e-5, rtol=1e-5)

    # bf16 I/O path (accumulation / gating still in f32 inside the kernels)
    x_bf16 = x.astype(jnp.bfloat16)
    out_bf16 = jax.block_until_ready(channel_attention(x_bf16, fc1_w, fc2_w))
    ref_bf16 = _reference(x_bf16, fc1_w, fc2_w)
    assert out_bf16.dtype == jnp.bfloat16
    assert jnp.allclose(out_bf16.astype(jnp.float32),
                        ref_bf16.astype(jnp.float32), atol=5e-2, rtol=5e-2)

    print("KERNEL_OK")
</pallas_src>

<mosaic_0001>
module attributes {stable_mosaic.version = 11 : i64} {
  func.func @_pool_kernel(%arg0: i32, %arg1: i32, %arg2: memref<1x32x256xf32, #tpu.memory_space<vmem>>, %arg3: memref<1x32x1xf32, #tpu.memory_space<vmem>>, %arg4: memref<1x32x1xf32, #tpu.memory_space<vmem>>) attributes {dimension_semantics = [#tpu.dimension_semantics<parallel>, #tpu.dimension_semantics<arbitrary>], iteration_bounds = array<i64: 2, 1>, scalar_prefetch = 0 : i64, scratch_operands = 0 : i64, tpu.core_type = #tpu.core_type<tc>, window_params = [{transform_indices = @transform_0, window_bounds = array<i64: 1, 32, 256>}, {transform_indices = @transform_1, window_bounds = array<i64: 1, 32, 1>}, {transform_indices = @transform_2, window_bounds = array<i64: 1, 32, 1>}]} {
    %c0 = arith.constant 0 : index
    %c0_0 = arith.constant 0 : index
    %c0_1 = arith.constant 0 : index
    %0 = vector.load %arg2[%c0, %c0_0, %c0_1] : memref<1x32x256xf32, #tpu.memory_space<vmem>>, vector<1x32x256xf32>
    %cst = arith.constant dense<0.000000e+00> : vector<1x32xf32>
    %1 = vector.multi_reduction <add>, %0, %cst [2] : vector<1x32x256xf32> to vector<1x32xf32>
    %2 = vector.shape_cast %1 : vector<1x32xf32> to vector<1x32x1xf32>
    %cst_2 = arith.constant dense<0xFF800000> : vector<1x32xf32>
    %3 = vector.multi_reduction <maximumf>, %0, %cst_2 [2] : vector<1x32x256xf32> to vector<1x32xf32>
    %4 = vector.shape_cast %3 : vector<1x32xf32> to vector<1x32x1xf32>
    %c0_i32 = arith.constant 0 : i32
    %5 = arith.cmpi eq, %arg1, %c0_i32 : i32
    %6 = arith.extui %5 : i1 to i32
    %c0_i32_3 = arith.constant 0 : i32
    %7 = arith.cmpi ne, %6, %c0_i32_3 : i32
    scf.if %7 {
      %c0_6 = arith.constant 0 : index
      %c0_7 = arith.constant 0 : index
      %c0_8 = arith.constant 0 : index
      %11 = vector.load %arg3[%c0_6, %c0_7, %c0_8] : memref<1x32x1xf32, #tpu.memory_space<vmem>>, vector<1x32x1xf32>
      tpu.vector_store %arg3[%c0_6, %c0_7, %c0_8], %2 {strides = array<i32>} : memref<1x32x1xf32, #tpu.memory_space<vmem>>, vector<1x32x1xf32>,
      %c0_9 = arith.constant 0 : index
      %c0_10 = arith.constant 0 : index
      %c0_11 = arith.constant 0 : index
      %12 = vector.load %arg4[%c0_9, %c0_10, %c0_11] : memref<1x32x1xf32, #tpu.memory_space<vmem>>, vector<1x32x1xf32>
      tpu.vector_store %arg4[%c0_9, %c0_10, %c0_11], %4 {strides = array<i32>} : memref<1x32x1xf32, #tpu.memory_space<vmem>>, vector<1x32x1xf32>,
    } else {
    }
    %c0_i32_4 = arith.constant 0 : i32
    %8 = arith.cmpi sgt, %arg1, %c0_i32_4 : i32
    %9 = arith.extui %8 : i1 to i32
    %c0_i32_5 = arith.constant 0 : i32
    %10 = arith.cmpi ne, %9, %c0_i32_5 : i32
    scf.if %10 {
      %c0_6 = arith.constant 0 : index
      %c0_7 = arith.constant 0 : index
      %c0_8 = arith.constant 0 : index
      %11 = vector.load %arg3[%c0_6, %c0_7, %c0_8] : memref<1x32x1xf32, #tpu.memory_space<vmem>>, vector<1x32x1xf32>
      %12 = arith.addf %11, %2 : vector<1x32x1xf32>
      %c0_9 = arith.constant 0 : index
      %c0_10 = arith.constant 0 : index
      %c0_11 = arith.constant 0 : index
      %13 = vector.load %arg3[%c0_9, %c0_10, %c0_11] : memref<1x32x1xf32, #tpu.memory_space<vmem>>, vector<1x32x1xf32>
      tpu.vector_store %arg3[%c0_9, %c0_10, %c0_11], %12 {strides = array<i32>} : memref<1x32x1xf32, #tpu.memory_space<vmem>>, vector<1x32x1xf32>,
      %c0_12 = arith.constant 0 : index
      %c0_13 = arith.constant 0 : index
      %c0_14 = arith.constant 0 : index
      %14 = vector.load %arg4[%c0_12, %c0_13, %c0_14] : memref<1x32x1xf32, #tpu.memory_space<vmem>>, vector<1x32x1xf32>
      %15 = arith.maximumf %14, %4 : vector<1x32x1xf32>
      %c0_15 = arith.constant 0 : index
      %c0_16 = arith.constant 0 : index
      %c0_17 = arith.constant 0 : index
      %16 = vector.load %arg4[%c0_15, %c0_16, %c0_17] : memref<1x32x1xf32, #tpu.memory_space<vmem>>, vector<1x32x1xf32>
      tpu.vector_store %arg4[%c0_15, %c0_16, %c0_17], %15 {strides = array<i32>} : memref<1x32x1xf32, #tpu.memory_space<vmem>>, vector<1x32x1xf32>,
    } else {
    }
    return
  }
  func.func @transform_0(%arg0: i32, %arg1: i32) -> (i32, i32, i32) {
    %c0_i32 = arith.constant 0 : i32
    %c0_i32_0 = arith.constant 0 : i32
    return %arg0, %c0_i32, %arg1 : i32, i32, i32
  }
  func.func @transform_1(%arg0: i32, %arg1: i32) -> (i32, i32, i32) {
    %c0_i32 = arith.constant 0 : i32
    %c0_i32_0 = arith.constant 0 : i32
    %c0_i32_1 = arith.constant 0 : i32
    return %arg0, %c0_i32, %c0_i32_0 : i32, i32, i32
  }
  func.func @transform_2(%arg0: i32, %arg1: i32) -> (i32, i32, i32) {
    %c0_i32 = arith.constant 0 : i32
    %c0_i32_0 = arith.constant 0 : i32
    %c0_i32_1 = arith.constant 0 : i32
    return %arg0, %c0_i32, %c0_i32_0 : i32, i32, i32
  }
}

module attributes {stable_mosaic.version = 11 : i64} {
  func.func @_scale_kernel(%arg0: i32, %arg1: i32, %arg2: memref<1x32x256xf32, #tpu.memory_space<vmem>>, %arg3: memref<1x32x1xf32, #tpu.memory_space<vmem>>, %arg4: memref<1x32x256xf32, #tpu.memory_space<vmem>>) attributes {dimension_semantics = [#tpu.dimension_semantics<parallel>, #tpu.dimension_semantics<parallel>], iteration_bounds = array<i64: 2, 1>, scalar_prefetch = 0 : i64, scratch_operands = 0 : i64, tpu.core_type = #tpu.core_type<tc>, window_params = [{transform_indices = @transform_0, window_bounds = array<i64: 1, 32, 256>}, {transform_indices = @transform_1, window_bounds = array<i64: 1, 32, 1>}, {transform_indices = @transform_2, window_bounds = array<i64: 1, 32, 256>}]} {
    %c0 = arith.constant 0 : index
    %c0_0 = arith.constant 0 : index
    %c0_1 = arith.constant 0 : index
    %0 = vector.load %arg3[%c0, %c0_0, %c0_1] : memref<1x32x1xf32, #tpu.memory_space<vmem>>, vector<1x32x1xf32>
    %c0_2 = arith.constant 0 : index
    %c0_3 = arith.constant 0 : index
    %c0_4 = arith.constant 0 : index
    %1 = vector.load %arg2[%c0_2, %c0_3, %c0_4] : memref<1x32x256xf32, #tpu.memory_space<vmem>>, vector<1x32x256xf32>
    %2 = vector.broadcast %0 : vector<1x32x1xf32> to vector<1x32x256xf32>
    %3 = arith.mulf %1, %2 : vector<1x32x256xf32>
    %c0_5 = arith.constant 0 : index
    %c0_6 = arith.constant 0 : index
    %c0_7 = arith.constant 0 : index
    %4 = vector.load %arg4[%c0_5, %c0_6, %c0_7] : memref<1x32x256xf32, #tpu.memory_space<vmem>>, vector<1x32x256xf32>
    tpu.vector_store %arg4[%c0_5, %c0_6, %c0_7], %3 {strides = array<i32>} : memref<1x32x256xf32, #tpu.memory_space<vmem>>, vector<1x32x256xf32>,
    return
  }
  func.func @transform_0(%arg0: i32, %arg1: i32) -> (i32, i32, i32) {
    %c0_i32 = arith.constant 0 : i32
    %c0_i32_0 = arith.constant 0 : i32
    return %arg0, %c0_i32, %arg1 : i32, i32, i32
  }
  func.func @transform_1(%arg0: i32, %arg1: i32) -> (i32, i32, i32) {
    %c0_i32 = arith.constant 0 : i32
    %c0_i32_0 = arith.constant 0 : i32
    %c0_i32_1 = arith.constant 0 : i32
    return %arg0, %c0_i32, %c0_i32_0 : i32, i32, i32
  }
  func.func @transform_2(%arg0: i32, %arg1: i32) -> (i32, i32, i32) {
    %c0_i32 = arith.constant 0 : i32
    %c0_i32_0 = arith.constant 0 : i32
    return %arg0, %c0_i32, %arg1 : i32, i32, i32
  }
}

</mosaic_0001>

<llo_original>
// kernel: channel_attention.2
$region0: #{channel_attention.2}
  #allocation0 [shape = 'u32[]', space=smem, size = 0x4, offset = 0x4, fixed_abs, tag = 'smem constant byte address 0x4 - core index']
  #allocation1 [shape = 'u32[144,128]{1,0:T(1,128)}', space=vmem, size = 0x12000, scoped, tag = 'internal scratch']
  %s0 = inlined_call_operand.vmem [shape: f32[2,32,256], index: 0, kind: input, shape index: {}]
  %s1 = inlined_call_operand.vmem [shape: f32[2,32,1], index: 1, kind: output, shape index: {0}]
  %s2 = inlined_call_operand.vmem [shape: f32[2,32,1], index: 2, kind: output, shape index: {1}]
  %3 = xla_tuple %s1, %s2
  %s4 = sld [smem:[#allocation0]]
  $region53: #{channel_attention.2} parent=0
    _
  %s6 = ssub.s32 1, %s4
  %s7 = scalar_select 0, %s6, %s4
  loop: start=0, step=1, limit=4
  $region2: #{channel_attention.2} parent=0 // loop_pre_header
    _
  $region3: #{channel_attention.2} parent=0 // loop_header
    %s9 = sphi 0, %s13
    %p10 = scmp.ge.s32.totalorder %s9, 4
    %s16 = sphi 0, %s28
    %s17 = sphi 0, %s24
    %s18 = sphi 0, %s16
    %s19 = sphi 0, %s17
    %s20 = sphi 0, %s18
    %s21 = sphi 0, %s19
    %s33 = sphi 0, %s35
    %s36 = sphi 0, %s33
    %s37 = sphi 0, %s36
    %s53 = sphi 0, %s37
    %s59 = sphi 0, %s61
    %s62 = sphi 0, %s59
    %s63 = sphi 0, %s62
    %s79 = sphi 0, %s63
    %s85 = sphi 0, %s87
    %s88 = sphi 0, %s85
    %s89 = sphi 0, %s88
    %s105 = sphi 0, %s89
  $region4: #{channel_attention.2} parent=0 // loop_header_branch
    %12 = sbr.rel (%p10) target = $region8
  $region5: #{channel_attention.2} parent=0 // loop_body
    %s14 = ssub.s32 %s9, 1
    %s15 = ssub.s32 %s9, 2
    %s22 = sadd.s32 1, %s17
    %p23 = scmp.ge.s32.totalorder %s22, 1
    %s24 = scalar_select %p23, 0, %s22
    %s25 = sadd.s32 1, %s16
    %s26 = scalar_select %p23, %s25, %s16
    %p27 = scmp.ge.s32.totalorder %s26, 2
    %s28 = scalar_select %p27, 0, %s26
    %s29 = ssub.s32 %s16, %s28
    %s30 = ssub.s32 %s17, %s24
    %s31 = sor.u32 %s29, %s30
    %p32 = scmp.eq.s32.totalorder %s31, 0
    %s34 = sadd.s32 %s33, 1
    %s35 = scalar_select %p32, %s33, %s34
    %p38 = pneg %p32
    %p39 = scmp.eq.s32.totalorder %s9, 1
    %p40 = por %p38, %p39
    %p41 = scmp.ne.s32.totalorder %s33, %s36
    %p42 = scmp.eq.s32.totalorder %s9, 0
    %p43 = por %p41, %p42
    %p44 = scmp.ne.s32.totalorder %s33, %s36
    %p45 = scmp.eq.s32.totalorder %s14, 1
    %p46 = por %p44, %p45
    %p47 = scmp.ne.s32.totalorder %s36, %s37
    %p48 = scmp.eq.s32.totalorder %s14, 0
    %p49 = por %p47, %p48
    %p50 = scmp.ne.s32.totalorder %s36, %s37
    %p51 = scmp.eq.s32.totalorder %s15, 1
    %p52 = por %p50, %p51
    %p54 = scmp.ne.s32.totalorder %s37, %s53
    %p55 = scmp.eq.s32.totalorder %s15, 0
    %p56 = por %p54, %p55
    %s57 = ssub.s32 %s16, %s28
    %p58 = scmp.eq.s32.totalorder %s57, 0
    %s60 = sadd.s32 %s59, 1
    %s61 = scalar_select %p58, %s59, %s60
    %p64 = pneg %p58
    %p65 = scmp.eq.s32.totalorder %s9, 1
    %p66 = por %p64, %p65
    %p67 = scmp.ne.s32.totalorder %s59, %s62
    %p68 = scmp.eq.s32.totalorder %s9, 0
    %p69 = por %p67, %p68
    %p70 = scmp.ne.s32.totalorder %s59, %s62
    %p71 = scmp.eq.s32.totalorder %s14, 1
    %p72 = por %p70, %p71
    %p73 = scmp.ne.s32.totalorder %s62, %s63
    %p74 = scmp.eq.s32.totalorder %s14, 0
    %p75 = por %p73, %p74
    %p76 = scmp.ne.s32.totalorder %s62, %s63
    %p77 = scmp.eq.s32.totalorder %s15, 1
    %p78 = por %p76, %p77
    %p80 = scmp.ne.s32.totalorder %s63, %s79
    %p81 = scmp.eq.s32.totalorder %s15, 0
    %p82 = por %p80, %p81
    %s83 = ssub.s32 %s16, %s28
    %p84 = scmp.eq.s32.totalorder %s83, 0
    %s86 = sadd.s32 %s85, 1
    %s87 = scalar_select %p84, %s85, %s86
    %p90 = pneg %p84
    %p91 = scmp.eq.s32.totalorder %s9, 1
    %p92 = por %p90, %p91
    %p93 = scmp.ne.s32.totalorder %s85, %s88
    %p94 = scmp.eq.s32.totalorder %s9, 0
    %p95 = por %p93, %p94
    %p96 = scmp.ne.s32.totalorder %s85, %s88
    %p97 = scmp.eq.s32.totalorder %s14, 1
    %p98 = por %p96, %p97
    %p99 = scmp.ne.s32.totalorder %s88, %s89
    %p100 = scmp.eq.s32.totalorder %s14, 0
    %p101 = por %p99, %p100
    %p102 = scmp.ne.s32.totalorder %s88, %s89
    %p103 = scmp.eq.s32.totalorder %s15, 1
    %p104 = por %p102, %p103
    %p106 = scmp.ne.s32.totalorder %s89, %s105
    %p107 = scmp.eq.s32.totalorder %s15, 0
    %p108 = por %p106, %p107
    %p109 = scmp.le.s32.totalorder 1, %s9
    %p110 = scmp.lt.s32.totalorder %s9, 3
    %p111 = pnand %p109, %p110
    %p112 = pneg %p111
    // Predicated region
    $region9: #{channel_attention.2} parent=5 // pred_check
      _
    $region10: #{channel_attention.2} parent=5 // pred_check_branch
      %114 = sbr.rel (%p111) target = $region12
    $region11: #{channel_attention.2} parent=5 // pred_region
      %s115 = ssub.s32 %s9, 1
    $region12: #{channel_attention.2} parent=5 // pred_fallthru
      _
    %p116 = scmp.lt.s32.totalorder %s9, 2
    // Predicated region
    $region13: #{channel_attention.2} parent=5 // pred_check
      %p117 = pneg %p116
    $region14: #{channel_attention.2} parent=5 // pred_check_branch
      %119 = sbr.rel (%p117) target = $region16
    $region15: #{channel_attention.2} parent=5 // pred_region
      // Predicated region
      $region17: #{channel_attention.2} parent=15 // pred_check
        %p120 = pneg %p43
      $region18: #{channel_attention.2} parent=15 // pred_check_branch
        %122 = sbr.rel (%p120) target = $region20
      $region19: #{channel_attention.2} parent=15 // pred_region
        %s123 = smul.u32 2, %s17
        %p124 = scmp.lt.s32.totalorder %s16, 1
        %s125 = scalar_select %p124, %s16, 1
        %p126 = scmp.lt.s32.totalorder %s123, 1
        %s127 = scalar_select %p126, %s123, 1
        %s128 = smul.addr %s125, 8
        %s129 = sadd.s32 %s127, %s128
        %s130 = smul.addr %s129, 8
        %s131 = scalar_lea.vmem %s0, %s130
        %s132 = smul.u32 2, %s17
      $region20: #{channel_attention.2} parent=15 // pred_fallthru
        _
    $region16: #{channel_attention.2} parent=5 // pred_fallthru
      _
    %p133 = scmp.le.s32.totalorder 1, %s9
    %p134 = scmp.lt.s32.totalorder %s9, 3
    %p135 = pnand %p133, %p134
    %p136 = pneg %p135
    // Predicated region
    $region21: #{channel_attention.2} parent=5 // pred_check
      _
    $region22: #{channel_attention.2} parent=5 // pred_check_branch
      %138 = sbr.rel (%p135) target = $region24
    $region23: #{channel_attention.2} parent=5 // pred_region
      %s139 = ssub.s32 %s9, 1
      %s140 = smul.u32 2, %s19
      %p141 = scmp.lt.s32.totalorder %s18, 1
      %s142 = scalar_select %p141, %s18, 1
      %p143 = scmp.lt.s32.totalorder %s140, 1
      %s144 = scalar_select %p143, %s140, 1
      %s145 = smul.addr %s142, 8
      %s146 = sadd.s32 %s144, %s145
      %s147 = smul.addr %s146, 8
      %s148 = scalar_lea.vmem %s0, %s147
      %p149 = pneg %p49
      %p150 = pneg %p46
      %p151 = pneg %p75
      %p152 = pneg %p72
      %p153 = scmp.lt.s32.totalorder %s18, 1
      %s154 = scalar_select %p153, %s18, 1
      %s155 = smul.addr %s154, 4
      %s156 = smul.addr %s155, 8
      %s157 = scalar_lea.vmem %s1, %s156
      %p158 = pneg %p101
      %p159 = pneg %p98
      %p160 = scmp.lt.s32.totalorder %s18, 1
      %s161 = scalar_select %p160, %s18, 1
      %s162 = smul.addr %s161, 4
      %s163 = smul.addr %s162, 8
      %s164 = scalar_lea.vmem %s2, %s163
      %s165 = smul.u32 2, %s19
      %p166 = scmp.lt.s32.totalorder %s18, 1
      %s167 = scalar_select %p166, %s18, 1
      %p168 = scmp.lt.s32.totalorder %s165, 1
      %s169 = scalar_select %p168, %s165, 1
      %s170 = smul.addr %s167, 8
      %s171 = sadd.s32 %s169, %s170
      %s172 = smul.addr %s171, 8
      %s173 = scalar_lea.vmem %s0, %s172
      %s174 = smul.u32 2, %s19
      %p175 = scmp.lt.s32.totalorder %s18, 1
      %s176 = scalar_select %p175, %s18, 1
      %s177 = smul.addr %s176, 4
      %s178 = smul.addr %s177, 8
      %s179 = scalar_lea.vmem %s1, %s178
      %p180 = scmp.lt.s32.totalorder %s18, 1
      %s181 = scalar_select %p180, %s18, 1
      %s182 = smul.addr %s181, 4
      %s183 = smul.addr %s182, 8
      %s184 = scalar_lea.vmem %s2, %s183
      %v185 = vld [vmem:[%s173] sm:$0xff]
      %v186 = vld [vmem:[%s173 + $0x8] sm:$0xff]
      %v187 = vld [vmem:[%s173 + $0x10] sm:$0xff]
      %v188 = vld [vmem:[%s173 + $0x18] sm:$0xff]
      %v189 = vld [vmem:[%s173 + $0x20] sm:$0xff]
      %v190 = vld [vmem:[%s173 + $0x28] sm:$0xff]
      %v191 = vld [vmem:[%s173 + $0x30] sm:$0xff]
      %v192 = vld [vmem:[%s173 + $0x38] sm:$0xff]
      %v193 = vadd.f32 %v185, %v186
      %194 = vadd.xlane.f32.xlu0 %v193
      %v195 = vpop.xlane.xlu0 %194
      %v196 = vadd.f32 %v187, %v188
      %197 = vadd.xlane.f32.xlu0 %v196
      %v198 = vpop.xlane.xlu0 %197
      %v199 = vadd.f32 %v189, %v190
      %200 = vadd.xlane.f32.xlu0 %v199
      %v201 = vpop.xlane.xlu0 %200
      %v202 = vadd.f32 %v191, %v192
      %203 = vadd.xlane.f32.xlu0 %v202
      %v204 = vpop.xlane.xlu0 %203
      %v205 = vmax.f32 %v185, %v186
      %206 = vmax.xlane.f32.xlu0 %v205
      %v207 = vpop.xlane.xlu0 %206
      %v208 = vmax.f32 %v187, %v188
      %209 = vmax.xlane.f32.xlu0 %v208
      %v210 = vpop.xlane.xlu0 %209
      %v211 = vmax.f32 %v189, %v190
      %212 = vmax.xlane.f32.xlu0 %v211
      %v213 = vpop.xlane.xlu0 %212
      %v214 = vmax.f32 %v191, %v192
      %215 = vmax.xlane.f32.xlu0 %v214
      %v216 = vpop.xlane.xlu0 %215
      %p217 = scmp.eq.s32.totalorder %s19, 0
      // Predicated region
      $region25: #{channel_attention.2} parent=23 // pred_check
        %p218 = pneg %p217
      $region26: #{channel_attention.2} parent=23 // pred_check_branch
        %220 = sbr.rel (%p218) target = $region28
      $region27: #{channel_attention.2} parent=23 // pred_region
        %vm221 = vcmask 7168
        %222 = vst.msk [vmem:[%s179] sm:$0xff] %vm221, %v195
        %223 = vst.msk [vmem:[%s179 + $0x8] sm:$0xff] %vm221, %v198
        %224 = vst.msk [vmem:[%s179 + $0x10] sm:$0xff] %vm221, %v201
        %225 = vst.msk [vmem:[%s179 + $0x18] sm:$0xff] %vm221, %v204
        %226 = vst.msk [vmem:[%s184] sm:$0xff] %vm221, %v207
        %227 = vst.msk [vmem:[%s184 + $0x8] sm:$0xff] %vm221, %v210
        %228 = vst.msk [vmem:[%s184 + $0x10] sm:$0xff] %vm221, %v213
        %229 = vst.msk [vmem:[%s184 + $0x18] sm:$0xff] %vm221, %v216
      $region28: #{channel_attention.2} parent=23 // pred_fallthru
        _
      %p230 = scmp.gt.s32.totalorder %s19, 0
      // Predicated region
      $region29: #{channel_attention.2} parent=23 // pred_check
        %p231 = pneg %p230
      $region30: #{channel_attention.2} parent=23 // pred_check_branch
        %233 = sbr.rel (%p231) target = $region32
      $region31: #{channel_attention.2} parent=23 // pred_region
        %v234 = vld [vmem:[%s179] sm:$0xff]
        %v235 = vld [vmem:[%s179 + $0x8] sm:$0xff]
        %v236 = vld [vmem:[%s179 + $0x10] sm:$0xff]
        %v237 = vld [vmem:[%s179 + $0x18] sm:$0xff]
        %v238 = vadd.f32 %v234, %v195
        %v239 = vadd.f32 %v235, %v198
        %v240 = vadd.f32 %v236, %v201
        %v241 = vadd.f32 %v237, %v204
        %vm242 = vcmask 7168
        %243 = vst.msk [vmem:[%s179] sm:$0xff] %vm242, %v238
        %244 = vst.msk [vmem:[%s179 + $0x8] sm:$0xff] %vm242, %v239
        %245 = vst.msk [vmem:[%s179 + $0x10] sm:$0xff] %vm242, %v240
        %246 = vst.msk [vmem:[%s179 + $0x18] sm:$0xff] %vm242, %v241
        %v247 = vld [vmem:[%s184] sm:$0xff]
        %v248 = vld [vmem:[%s184 + $0x8] sm:$0xff]
        %v249 = vld [vmem:[%s184 + $0x10] sm:$0xff]
        %v250 = vld [vmem:[%s184 + $0x18] sm:$0xff]
        %v251 = vmax.f32 %v247, %v207
        %v252 = vmax.f32 %v248, %v210
        %v253 = vmax.f32 %v249, %v213
        %v254 = vmax.f32 %v250, %v216
        %255 = vst.msk [vmem:[%s184] sm:$0xff] %vm242, %v251
        %256 = vst.msk [vmem:[%s184 + $0x8] sm:$0xff] %vm242, %v252
        %257 = vst.msk [vmem:[%s184 + $0x10] sm:$0xff] %vm242, %v253
        %258 = vst.msk [vmem:[%s184 + $0x18] sm:$0xff] %vm242, %v254
      $region32: #{channel_attention.2} parent=23 // pred_fallthru
        _
      %p259 = scmp.lt.s32.totalorder %s18, 1
      %s260 = scalar_select %p259, %s18, 1
      %s261 = smul.addr %s260, 4
      %s262 = smul.addr %s261, 8
      %s263 = scalar_lea.vmem %s1, %s262
      %p264 = scmp.lt.s32.totalorder %s18, 1
      %s265 = scalar_select %p264, %s18, 1
      %s266 = smul.addr %s265, 4
      %s267 = smul.addr %s266, 8
      %s268 = scalar_lea.vmem %s2, %s267
      // Predicated region
      $region33: #{channel_attention.2} parent=23 // pred_check
        %p269 = pneg %p72
      $region34: #{channel_attention.2} parent=23 // pred_check_branch
        %271 = sbr.rel (%p269) target = $region36
      $region35: #{channel_attention.2} parent=23 // pred_region
        _
      $region36: #{channel_attention.2} parent=23 // pred_fallthru
        _
      // Predicated region
      $region37: #{channel_attention.2} parent=23 // pred_check
        %p272 = pneg %p98
      $region38: #{channel_attention.2} parent=23 // pred_check_branch
        %274 = sbr.rel (%p272) target = $region40
      $region39: #{channel_attention.2} parent=23 // pred_region
        _
      $region40: #{channel_attention.2} parent=23 // pred_fallthru
        _
    $region24: #{channel_attention.2} parent=5 // pred_fallthru
      _
    %p275 = scmp.le.s32.totalorder 2, %s9
    // Predicated region
    $region41: #{channel_attention.2} parent=5 // pred_check
      %p276 = pneg %p275
    $region42: #{channel_attention.2} parent=5 // pred_check_branch
      %278 = sbr.rel (%p276) target = $region44
    $region43: #{channel_attention.2} parent=5 // pred_region
      %s279 = ssub.s32 %s9, 2
      // Predicated region
      $region45: #{channel_attention.2} parent=43 // pred_check
        %p280 = pneg %p78
      $region46: #{channel_attention.2} parent=43 // pred_check_branch
        %282 = sbr.rel (%p280) target = $region48
      $region47: #{channel_attention.2} parent=43 // pred_region
        %p283 = scmp.lt.s32.totalorder %s20, 1
        %s284 = scalar_select %p283, %s20, 1
        %s285 = smul.addr %s284, 4
        %s286 = smul.addr %s285, 8
        %s287 = scalar_lea.vmem %s1, %s286
      $region48: #{channel_attention.2} parent=43 // pred_fallthru
        _
      // Predicated region
      $region49: #{channel_attention.2} parent=43 // pred_check
        %p288 = pneg %p104
      $region50: #{channel_attention.2} parent=43 // pred_check_branch
        %290 = sbr.rel (%p288) target = $region52
      $region51: #{channel_attention.2} parent=43 // pred_region
        %p291 = scmp.lt.s32.totalorder %s20, 1
        %s292 = scalar_select %p291, %s20, 1
        %s293 = smul.addr %s292, 4
        %s294 = smul.addr %s293, 8
        %s295 = scalar_lea.vmem %s2, %s294
      $region52: #{channel_attention.2} parent=43 // pred_fallthru
        _
    $region44: #{channel_attention.2} parent=5 // pred_fallthru
      _
  $region6: #{channel_attention.2} parent=0 // loop_footer
    %s13 = sadd.s32 1, %s9
  $region7: #{channel_attention.2} parent=0 // loop_footer_branch
    %8 = sbr.rel target = $region3
  $region8: #{channel_attention.2} parent=0 // loop_exit
    _

// kernel: channel_attention.3
$region0: #{channel_attention.3}
  #allocation0 [shape = 'u32[]', space=smem, size = 0x4, offset = 0x4, fixed_abs, tag = 'smem constant byte address 0x4 - core index']
  #allocation1 [shape = 'u32[144,128]{1,0:T(1,128)}', space=vmem, size = 0x12000, scoped, tag = 'internal scratch']
  %s0 = inlined_call_operand.vmem [shape: f32[2,32,256], index: 0, kind: input, shape index: {}]
  %s1 = inlined_call_operand.vmem [shape: f32[2,32,1], index: 1, kind: input, shape index: {}]
  %s2 = inlined_call_operand.vmem [shape: f32[2,32,256], index: 2, kind: output, shape index: {}]
  %s3 = sld [smem:[#allocation0]]
  $region41: #{channel_attention.3} parent=0
    _
  %s5 = ssub.s32 1, %s3
  %s6 = scalar_select 0, %s5, %s3
  loop: start=0, step=1, limit=4
  $region2: #{channel_attention.3} parent=0 // loop_pre_header
    _
  $region3: #{channel_attention.3} parent=0 // loop_header
    %s8 = sphi 0, %s12
    %p9 = scmp.ge.s32.totalorder %s8, 4
    %s15 = sphi 0, %s27
    %s16 = sphi 0, %s23
    %s17 = sphi 0, %s15
    %s18 = sphi 0, %s16
    %s19 = sphi 0, %s17
    %s20 = sphi 0, %s18
    %s32 = sphi 0, %s34
    %s35 = sphi 0, %s32
    %s36 = sphi 0, %s35
    %s52 = sphi 0, %s36
    %s58 = sphi 0, %s60
    %s61 = sphi 0, %s58
    %s62 = sphi 0, %s61
    %s78 = sphi 0, %s62
    %s86 = sphi 0, %s88
    %s89 = sphi 0, %s86
    %s90 = sphi 0, %s89
    %s106 = sphi 0, %s90
  $region4: #{channel_attention.3} parent=0 // loop_header_branch
    %11 = sbr.rel (%p9) target = $region8
  $region5: #{channel_attention.3} parent=0 // loop_body
    %s13 = ssub.s32 %s8, 1
    %s14 = ssub.s32 %s8, 2
    %s21 = sadd.s32 1, %s16
    %p22 = scmp.ge.s32.totalorder %s21, 1
    %s23 = scalar_select %p22, 0, %s21
    %s24 = sadd.s32 1, %s15
    %s25 = scalar_select %p22, %s24, %s15
    %p26 = scmp.ge.s32.totalorder %s25, 2
    %s27 = scalar_select %p26, 0, %s25
    %s28 = ssub.s32 %s15, %s27
    %s29 = ssub.s32 %s16, %s23
    %s30 = sor.u32 %s28, %s29
    %p31 = scmp.eq.s32.totalorder %s30, 0
    %s33 = sadd.s32 %s32, 1
    %s34 = scalar_select %p31, %s32, %s33
    %p37 = pneg %p31
    %p38 = scmp.eq.s32.totalorder %s8, 1
    %p39 = por %p37, %p38
    %p40 = scmp.ne.s32.totalorder %s32, %s35
    %p41 = scmp.eq.s32.totalorder %s8, 0
    %p42 = por %p40, %p41
    %p43 = scmp.ne.s32.totalorder %s32, %s35
    %p44 = scmp.eq.s32.totalorder %s13, 1
    %p45 = por %p43, %p44
    %p46 = scmp.ne.s32.totalorder %s35, %s36
    %p47 = scmp.eq.s32.totalorder %s13, 0
    %p48 = por %p46, %p47
    %p49 = scmp.ne.s32.totalorder %s35, %s36
    %p50 = scmp.eq.s32.totalorder %s14, 1
    %p51 = por %p49, %p50
    %p53 = scmp.ne.s32.totalorder %s36, %s52
    %p54 = scmp.eq.s32.totalorder %s14, 0
    %p55 = por %p53, %p54
    %s56 = ssub.s32 %s15, %s27
    %p57 = scmp.eq.s32.totalorder %s56, 0
    %s59 = sadd.s32 %s58, 1
    %s60 = scalar_select %p57, %s58, %s59
    %p63 = pneg %p57
    %p64 = scmp.eq.s32.totalorder %s8, 1
    %p65 = por %p63, %p64
    %p66 = scmp.ne.s32.totalorder %s58, %s61
    %p67 = scmp.eq.s32.totalorder %s8, 0
    %p68 = por %p66, %p67
    %p69 = scmp.ne.s32.totalorder %s58, %s61
    %p70 = scmp.eq.s32.totalorder %s13, 1
    %p71 = por %p69, %p70
    %p72 = scmp.ne.s32.totalorder %s61, %s62
    %p73 = scmp.eq.s32.totalorder %s13, 0
    %p74 = por %p72, %p73
    %p75 = scmp.ne.s32.totalorder %s61, %s62
    %p76 = scmp.eq.s32.totalorder %s14, 1
    %p77 = por %p75, %p76
    %p79 = scmp.ne.s32.totalorder %s62, %s78
    %p80 = scmp.eq.s32.totalorder %s14, 0
    %p81 = por %p79, %p80
    %s82 = ssub.s32 %s15, %s27
    %s83 = ssub.s32 %s16, %s23
    %s84 = sor.u32 %s82, %s83
    %p85 = scmp.eq.s32.totalorder %s84, 0
    %s87 = sadd.s32 %s86, 1
    %s88 = scalar_select %p85, %s86, %s87
    %p91 = pneg %p85
    %p92 = scmp.eq.s32.totalorder %s8, 1
    %p93 = por %p91, %p92
    %p94 = scmp.ne.s32.totalorder %s86, %s89
    %p95 = scmp.eq.s32.totalorder %s8, 0
    %p96 = por %p94, %p95
    %p97 = scmp.ne.s32.totalorder %s86, %s89
    %p98 = scmp.eq.s32.totalorder %s13, 1
    %p99 = por %p97, %p98
    %p100 = scmp.ne.s32.totalorder %s89, %s90
    %p101 = scmp.eq.s32.totalorder %s13, 0
    %p102 = por %p100, %p101
    %p103 = scmp.ne.s32.totalorder %s89, %s90
    %p104 = scmp.eq.s32.totalorder %s14, 1
    %p105 = por %p103, %p104
    %p107 = scmp.ne.s32.totalorder %s90, %s106
    %p108 = scmp.eq.s32.totalorder %s14, 0
    %p109 = por %p107, %p108
    %p110 = scmp.le.s32.totalorder 1, %s8
    %p111 = scmp.lt.s32.totalorder %s8, 3
    %p112 = pnand %p110, %p111
    %p113 = pneg %p112
    // Predicated region
    $region9: #{channel_attention.3} parent=5 // pred_check
      _
    $region10: #{channel_attention.3} parent=5 // pred_check_branch
      %115 = sbr.rel (%p112) target = $region12
    $region11: #{channel_attention.3} parent=5 // pred_region
      %s116 = ssub.s32 %s8, 1
    $region12: #{channel_attention.3} parent=5 // pred_fallthru
      _
    %p117 = scmp.lt.s32.totalorder %s8, 2
    // Predicated region
    $region13: #{channel_attention.3} parent=5 // pred_check
      %p118 = pneg %p117
    $region14: #{channel_attention.3} parent=5 // pred_check_branch
      %120 = sbr.rel (%p118) target = $region16
    $region15: #{channel_attention.3} parent=5 // pred_region
      // Predicated region
      $region17: #{channel_attention.3} parent=15 // pred_check
        %p121 = pneg %p42
      $region18: #{channel_attention.3} parent=15 // pred_check_branch
        %123 = sbr.rel (%p121) target = $region20
      $region19: #{channel_attention.3} parent=15 // pred_region
        %s124 = smul.u32 2, %s16
        %p125 = scmp.lt.s32.totalorder %s15, 1
        %s126 = scalar_select %p125, %s15, 1
        %p127 = scmp.lt.s32.totalorder %s124, 1
        %s128 = scalar_select %p127, %s124, 1
        %s129 = smul.addr %s126, 8
        %s130 = sadd.s32 %s128, %s129
        %s131 = smul.addr %s130, 8
        %s132 = scalar_lea.vmem %s0, %s131
        %s133 = smul.u32 2, %s16
      $region20: #{channel_attention.3} parent=15 // pred_fallthru
        _
      // Predicated region
      $region21: #{channel_attention.3} parent=15 // pred_check
        %p134 = pneg %p68
      $region22: #{channel_attention.3} parent=15 // pred_check_branch
        %136 = sbr.rel (%p134) target = $region24
      $region23: #{channel_attention.3} parent=15 // pred_region
        %p137 = scmp.lt.s32.totalorder %s15, 1
        %s138 = scalar_select %p137, %s15, 1
        %s139 = smul.addr %s138, 4
        %s140 = smul.addr %s139, 8
        %s141 = scalar_lea.vmem %s1, %s140
      $region24: #{channel_attention.3} parent=15 // pred_fallthru
        _
    $region16: #{channel_attention.3} parent=5 // pred_fallthru
      _
    %p142 = scmp.le.s32.totalorder 1, %s8
    %p143 = scmp.lt.s32.totalorder %s8, 3
    %p144 = pnand %p142, %p143
    %p145 = pneg %p144
    // Predicated region
    $region25: #{channel_attention.3} parent=5 // pred_check
      _
    $region26: #{channel_attention.3} parent=5 // pred_check_branch
      %147 = sbr.rel (%p144) target = $region28
    $region27: #{channel_attention.3} parent=5 // pred_region
      %s148 = ssub.s32 %s8, 1
      %s149 = smul.u32 2, %s18
      %p150 = scmp.lt.s32.totalorder %s17, 1
      %s151 = scalar_select %p150, %s17, 1
      %p152 = scmp.lt.s32.totalorder %s149, 1
      %s153 = scalar_select %p152, %s149, 1
      %s154 = smul.addr %s151, 8
      %s155 = sadd.s32 %s153, %s154
      %s156 = smul.addr %s155, 8
      %s157 = scalar_lea.vmem %s0, %s156
      %p158 = pneg %p48
      %p159 = pneg %p45
      %p160 = scmp.lt.s32.totalorder %s17, 1
      %s161 = scalar_select %p160, %s17, 1
      %s162 = smul.addr %s161, 4
      %s163 = smul.addr %s162, 8
      %s164 = scalar_lea.vmem %s1, %s163
      %p165 = pneg %p74
      %p166 = pneg %p71
      %p167 = pneg %p102
      %p168 = pneg %p99
      %s169 = smul.u32 2, %s18
      %p170 = scmp.lt.s32.totalorder %s17, 1
      %s171 = scalar_select %p170, %s17, 1
      %p172 = scmp.lt.s32.totalorder %s169, 1
      %s173 = scalar_select %p172, %s169, 1
      %s174 = smul.addr %s171, 8
      %s175 = sadd.s32 %s173, %s174
      %s176 = smul.addr %s175, 8
      %s177 = scalar_lea.vmem %s2, %s176
      %s178 = smul.u32 2, %s18
      %p179 = scmp.lt.s32.totalorder %s17, 1
      %s180 = scalar_select %p179, %s17, 1
      %p181 = scmp.lt.s32.totalorder %s178, 1
      %s182 = scalar_select %p181, %s178, 1
      %s183 = smul.addr %s180, 8
      %s184 = sadd.s32 %s182, %s183
      %s185 = smul.addr %s184, 8
      %s186 = scalar_lea.vmem %s0, %s185
      %s187 = smul.u32 2, %s18
      %p188 = scmp.lt.s32.totalorder %s17, 1
      %s189 = scalar_select %p188, %s17, 1
      %s190 = smul.addr %s189, 4
      %s191 = smul.addr %s190, 8
      %s192 = scalar_lea.vmem %s1, %s191
      %s193 = smul.u32 2, %s18
      %p194 = scmp.lt.s32.totalorder %s17, 1
      %s195 = scalar_select %p194, %s17, 1
      %p196 = scmp.lt.s32.totalorder %s193, 1
      %s197 = scalar_select %p196, %s193, 1
      %s198 = smul.addr %s195, 8
      %s199 = sadd.s32 %s197, %s198
      %s200 = smul.addr %s199, 8
      %s201 = scalar_lea.vmem %s2, %s200
      %s202 = smul.u32 2, %s18
      %v203 = vld [vmem:[%s192] sm:$0xff]
      %v204 = vld [vmem:[%s192 + $0x8] sm:$0xff]
      %v205 = vld [vmem:[%s192 + $0x10] sm:$0xff]
      %v206 = vld [vmem:[%s192 + $0x18] sm:$0xff]
      %v207 = vld [vmem:[%s186] sm:$0xff]
      %v208 = vld [vmem:[%s186 + $0x8] sm:$0xff]
      %v209 = vld [vmem:[%s186 + $0x10] sm:$0xff]
      %v210 = vld [vmem:[%s186 + $0x18] sm:$0xff]
      %v211 = vld [vmem:[%s186 + $0x20] sm:$0xff]
      %v212 = vld [vmem:[%s186 + $0x28] sm:$0xff]
      %v213 = vld [vmem:[%s186 + $0x30] sm:$0xff]
      %v214 = vld [vmem:[%s186 + $0x38] sm:$0xff]
      %216 = vset.pattern.permute.xlu0 0
      %217 = vperm.xlu0 %216, %v203
      %v218 = vpop.permute.xlu0 %217
      %221 = vset.pattern.permute.xlu0 0
      %222 = vperm.xlu0 %221, %v204
      %v223 = vpop.permute.xlu0 %222
      %226 = vset.pattern.permute.xlu0 0
      %227 = vperm.xlu0 %226, %v205
      %v228 = vpop.permute.xlu0 %227
      %231 = vset.pattern.permute.xlu0 0
      %232 = vperm.xlu0 %231, %v206
      %v233 = vpop.permute.xlu0 %232
      %v235 = vmul.f32 %v207, %v218
      %v236 = vmul.f32 %v208, %v218
      %v237 = vmul.f32 %v209, %v223
      %v238 = vmul.f32 %v210, %v223
      %v239 = vmul.f32 %v211, %v228
      %v240 = vmul.f32 %v212, %v228
      %v241 = vmul.f32 %v213, %v233
      %v242 = vmul.f32 %v214, %v233
      %243 = vst [vmem:[%s201] sm:$0xff] %v235
      %244 = vst [vmem:[%s201 + $0x8] sm:$0xff] %v236
      %245 = vst [vmem:[%s201 + $0x10] sm:$0xff] %v237
      %246 = vst [vmem:[%s201 + $0x18] sm:$0xff] %v238
      %247 = vst [vmem:[%s201 + $0x20] sm:$0xff] %v239
      %248 = vst [vmem:[%s201 + $0x28] sm:$0xff] %v240
      %249 = vst [vmem:[%s201 + $0x30] sm:$0xff] %v241
      %250 = vst [vmem:[%s201 + $0x38] sm:$0xff] %v242
      %s251 = smul.u32 2, %s18
      %p252 = scmp.lt.s32.totalorder %s17, 1
      %s253 = scalar_select %p252, %s17, 1
      %p254 = scmp.lt.s32.totalorder %s251, 1
      %s255 = scalar_select %p254, %s251, 1
      %s256 = smul.addr %s253, 8
      %s257 = sadd.s32 %s255, %s256
      %s258 = smul.addr %s257, 8
      %s259 = scalar_lea.vmem %s2, %s258
      // Predicated region
      $region29: #{channel_attention.3} parent=27 // pred_check
        %p260 = pneg %p99
      $region30: #{channel_attention.3} parent=27 // pred_check_branch
        %262 = sbr.rel (%p260) target = $region32
      $region31: #{channel_attention.3} parent=27 // pred_region
        %s263 = smul.u32 2, %s18
      $region32: #{channel_attention.3} parent=27 // pred_fallthru
        _
    $region28: #{channel_attention.3} parent=5 // pred_fallthru
      _
    %p264 = scmp.le.s32.totalorder 2, %s8
    // Predicated region
    $region33: #{channel_attention.3} parent=5 // pred_check
      %p265 = pneg %p264
    $region34: #{channel_attention.3} parent=5 // pred_check_branch
      %267 = sbr.rel (%p265) target = $region36
    $region35: #{channel_attention.3} parent=5 // pred_region
      %s268 = ssub.s32 %s8, 2
      // Predicated region
      $region37: #{channel_attention.3} parent=35 // pred_check
        %p269 = pneg %p105
      $region38: #{channel_attention.3} parent=35 // pred_check_branch
        %271 = sbr.rel (%p269) target = $region40
      $region39: #{channel_attention.3} parent=35 // pred_region
        %s272 = smul.u32 2, %s20
        %p273 = scmp.lt.s32.totalorder %s19, 1
        %s274 = scalar_select %p273, %s19, 1
        %p275 = scmp.lt.s32.totalorder %s272, 1
        %s276 = scalar_select %p275, %s272, 1
        %s277 = smul.addr %s274, 8
        %s278 = sadd.s32 %s276, %s277
        %s279 = smul.addr %s278, 8
        %s280 = scalar_lea.vmem %s2, %s279
      $region40: #{channel_attention.3} parent=35 // pred_fallthru
        _
    $region36: #{channel_attention.3} parent=5 // pred_fallthru
      _
  $region6: #{channel_attention.3} parent=0 // loop_footer
    %s12 = sadd.s32 1, %s8
  $region7: #{channel_attention.3} parent=0 // loop_footer_branch
    %7 = sbr.rel target = $region3
  $region8: #{channel_attention.3} parent=0 // loop_exit
    _

</llo_original>
